<compile_context>
chip_gen: v6e
topology: v6e:2x2x1
jax: 0.10.0
libtpu: 0.0.40
codegen_flags: <defaults>
</compile_context>

<pallas_src>
import jax
import jax.numpy as jnp
from jax.experimental import pallas as pl
from jax.experimental.pallas import tpu as pltpu


def _bi_lstm_step_kernel(ids_ref, w_ref, b_ref, state_ref, out_ref):
    K, G = w_ref.shape          # K = V + 2H, G = 8H
    H = G // 8
    V = K - 2 * H
    Bt = ids_ref.shape[0]

    # Embedding lookup as a one-hot selection folded into the fused matmul below.
    # TODO(synk): for realistic vocab sizes, replace this one-hot path with a
    # wrapper-side gather (x = emb[ids]) or a pl.Element row-gather BlockSpec so the
    # resident table / one-hot cost stays flat in V (matters for v7x's 64 MiB VMEM).
    ids = ids_ref[...]                                                  # (Bt, 1) int32
    vocab = jax.lax.broadcasted_iota(jnp.int32, (Bt, V), 1)
    onehot = (vocab == ids).astype(jnp.float32)                        # (Bt, V)

    h_both = state_ref[0]                                              # (Bt, 2H) = [h0_f | h0_b]
    c_both = state_ref[1]                                              # (Bt, 2H) = [c0_f | c0_b]

    # Single fused MXU dot: [onehot | h0_f | h0_b] (Bt, V+2H) @ W_all (V+2H, 8H).
    lhs = jnp.concatenate([onehot, h_both], axis=1)                    # (Bt, V+2H)
    gates = (jnp.dot(lhs, w_ref[...], preferred_element_type=jnp.float32)
             + b_ref[...])                                             # (Bt, 8H)

    # Gate columns are laid out [i_f, i_b, f_f, f_b, o_f, o_b | g_f, g_b] so the
    # sigmoid runs on one 6H-wide slab and the tanh on one 2H-wide slab.
    sig = jax.nn.sigmoid(gates[:, 0:6 * H])                            # (Bt, 6H)
    g_both = jnp.tanh(gates[:, 6 * H:8 * H])                           # (Bt, 2H)
    i_both = sig[:, 0:2 * H]
    f_both = sig[:, 2 * H:4 * H]
    o_both = sig[:, 4 * H:6 * H]

    c1 = f_both * c_both + i_both * g_both                             # (Bt, 2H) = [c1_f | c1_b]
    h1 = o_both * jnp.tanh(c1)                                         # (Bt, 2H) = [h1_f | h1_b]

    # Lane-dense packed store: [h_f | h_b | c_f | c_b] -> (Bt, 4H) contiguous.
    out_ref[...] = jnp.concatenate([h1, c1], axis=1)


def prepare_params(params):
    """One-time packing of PyTorch-layout params into the fused kernel layout.

    params: (emb (V,H), w_ih_f (4H,H), w_hh_f (4H,H), b_ih_f (4H,), b_hh_f (4H,),
             w_ih_b (4H,H), w_hh_b (4H,H), b_ih_b (4H,), b_hh_b (4H,)).
    Hoisted out of the forward path so the per-call wrapper does no weight repacking.
    """
    emb, w_ih_f, w_hh_f, b_ih_f, b_hh_f, w_ih_b, w_hh_b, b_ih_b, b_hh_b = params
    V, H = emb.shape
    f32 = jnp.float32
    hi = jax.lax.Precision.HIGHEST

    def gate_cols(w):  # PyTorch (4H, H), row blocks [i,f,g,o] -> 4 (H, H) column blocks of w^T
        wt = w.T.astype(f32)
        return wt[:, 0:H], wt[:, H:2 * H], wt[:, 2 * H:3 * H], wt[:, 3 * H:4 * H]

    # Column layout for all fused matrices: [i_f, i_b, f_f, f_b, o_f, o_b, g_f, g_b].
    xi_f, xf_f, xg_f, xo_f = gate_cols(w_ih_f)
    xi_b, xf_b, xg_b, xo_b = gate_cols(w_ih_b)
    w_x = jnp.concatenate([xi_f, xi_b, xf_f, xf_b, xo_f, xo_b, xg_f, xg_b], axis=1)  # (H, 8H)
    e_prime = jnp.dot(emb.astype(f32), w_x, precision=hi)                            # (V, 8H)

    hi_f, hf_f, hg_f, ho_f = gate_cols(w_hh_f)
    hi_b, hf_b, hg_b, ho_b = gate_cols(w_hh_b)
    z = jnp.zeros((H, H), f32)
    w_hf = jnp.concatenate([hi_f, z, hf_f, z, ho_f, z, hg_f, z], axis=1)  # rows fed by h0_fwd
    w_hb = jnp.concatenate([z, hi_b, z, hf_b, z, ho_b, z, hg_b], axis=1)  # rows fed by h0_bwd

    w_all = jnp.concatenate([e_prime, w_hf, w_hb], axis=0)                # (V + 2H, 8H)

    def gate_vec(b):
        b = b.astype(f32)
        return b[0:H], b[H:2 * H], b[2 * H:3 * H], b[3 * H:4 * H]

    bi_f, bf_f, bg_f, bo_f = gate_vec(b_ih_f + b_hh_f)
    bi_b, bf_b, bg_b, bo_b = gate_vec(b_ih_b + b_hh_b)
    b_all = jnp.concatenate(
        [bi_f, bi_b, bf_f, bf_b, bo_f, bo_b, bg_f, bg_b]).reshape(1, 8 * H)          # (1, 8H)

    return {"w_all": w_all, "b_all": b_all, "vocab_size": V, "hidden_size": H}


def bidirectional_encoder_forward(prepped, token_ids, hidden, *, b_tile=None):
    """Batched single-token bidirectional-LSTM encoder forward.

    prepped: output of prepare_params().
    token_ids: (B,) int32 -- B independent copies of the module's single-token forward.
    hidden: (h0, c0), each (2, B, H)   (num_directions, batch, H).
    Returns (output (1, B, 2H), (h_n (2, B, H), c_n (2, B, H))).
    """
    w_all, b_all = prepped["w_all"], prepped["b_all"]
    V, H = prepped["vocab_size"], prepped["hidden_size"]
    h0, c0 = hidden
    B = token_ids.shape[0]
    f32 = jnp.float32

    # Single grid step by default: at small/medium B the per-step pipeline overhead
    # dominates the ~100 KFLOP of work.  Tiling only kicks in for very large B and
    # then requires a sublane-aligned (multiple of 8) tile.
    if b_tile is None or b_tile >= B or B % b_tile != 0 or b_tile % 8 != 0:
        b_tile = B
    nb = B // b_tile

    ids2d = token_ids.reshape(B, 1).astype(jnp.int32)
    # state row 0 = [h0_fwd | h0_bwd], row 1 = [c0_fwd | c0_bwd]  -> (2, B, 2H)
    state0 = jnp.stack(
        [jnp.concatenate([h0[0], h0[1]], axis=-1),
         jnp.concatenate([c0[0], c0[1]], axis=-1)], axis=0).astype(f32)

    # NOTE: w_all / b_all have constant index_maps, so they stay resident across grid
    # steps; at large V they could additionally be single-buffered to halve their VMEM.
    packed = pl.pallas_call(
        _bi_lstm_step_kernel,
        out_shape=jax.ShapeDtypeStruct((B, 4 * H), f32),
        grid_spec=pltpu.PrefetchScalarGridSpec(
            num_scalar_prefetch=0,
            grid=(nb,),
            in_specs=[
                pl.BlockSpec((b_tile, 1), lambda b: (b, 0)),            # token ids
                pl.BlockSpec((V + 2 * H, 8 * H), lambda b: (0, 0)),     # fused weights (resident)
                pl.BlockSpec((1, 8 * H), lambda b: (0, 0)),             # fused biases (resident)
                pl.BlockSpec((2, b_tile, 2 * H), lambda b: (0, b, 0)),  # packed (h0, c0)
            ],
            out_specs=pl.BlockSpec((b_tile, 4 * H), lambda b: (b, 0)),
        ),
        compiler_params=pltpu.CompilerParams(
            dimension_semantics=("parallel",)),
    )(ids2d, w_all, b_all, state0)

    # packed[:, :2H] = [h_fwd | h_bwd] is already the module's `output` layout.
    output = packed[:, 0:2 * H][None]                       # (1, B, 2H) == (seq, batch, 2H)
    h_n = jnp.stack([packed[:, 0:H], packed[:, H:2 * H]], axis=0)           # (2, B, H)
    c_n = jnp.stack([packed[:, 2 * H:3 * H], packed[:, 3 * H:4 * H]], axis=0)  # (2, B, H)
    return output, (h_n, c_n)


if __name__ == "__main__":
    V = 64    # vocab_size
    H = 32    # hidden_size
    B = 16    # independent single-token instances batched into one pallas_call

    key = jax.random.PRNGKey(0)
    ks = jax.random.split(key, 12)

    def lstm_param(k, shape, fan_in):
        bound = 1.0 / float(fan_in) ** 0.5
        return jax.random.uniform(k, shape, jnp.float32, -bound, bound)

    emb = jax.random.normal(ks[0], (V, H), dtype=jnp.float32)
    w_ih_f = lstm_param(ks[1], (4 * H, H), H)
    w_hh_f = lstm_param(ks[2], (4 * H, H), H)
    b_ih_f = lstm_param(ks[3], (4 * H,), H)
    b_hh_f = lstm_param(ks[4], (4 * H,), H)
    w_ih_b = lstm_param(ks[5], (4 * H, H), H)
    w_hh_b = lstm_param(ks[6], (4 * H, H), H)
    b_ih_b = lstm_param(ks[7], (4 * H,), H)
    b_hh_b = lstm_param(ks[8], (4 * H,), H)
    params = (emb, w_ih_f, w_hh_f, b_ih_f, b_hh_f, w_ih_b, w_hh_b, b_ih_b, b_hh_b)

    token_ids = jax.random.randint(ks[9], (B,), 0, V, dtype=jnp.int32)
    h0 = jax.random.normal(ks[10], (2, B, H), dtype=jnp.float32)
    c0 = jax.random.normal(ks[11], (2, B, H), dtype=jnp.float32)

    prepped = jax.block_until_ready(prepare_params(params))   # one-time packing
    output, (h_n, c_n) = bidirectional_encoder_forward(prepped, token_ids, (h0, c0))
    output, h_n, c_n = jax.block_until_ready((output, h_n, c_n))

    # ---------------- Pure-JAX reference (matches PyTorch LSTM math) ----------------
    hi = jax.lax.Precision.HIGHEST
    x = emb[token_ids]                                        # (B, H)

    def ref_cell(x, h0d, c0d, w_ih, w_hh, b_ih, b_hh):
        g = (jnp.dot(x, w_ih.T, precision=hi) + jnp.dot(h0d, w_hh.T, precision=hi)
             + b_ih + b_hh)
        i = jax.nn.sigmoid(g[:, 0:H])
        f = jax.nn.sigmoid(g[:, H:2 * H])
        gg = jnp.tanh(g[:, 2 * H:3 * H])
        o = jax.nn.sigmoid(g[:, 3 * H:4 * H])
        c1 = f * c0d + i * gg
        h1 = o * jnp.tanh(c1)
        return h1, c1

    h1f_r, c1f_r = ref_cell(x, h0[0], c0[0], w_ih_f, w_hh_f, b_ih_f, b_hh_f)
    h1b_r, c1b_r = ref_cell(x, h0[1], c0[1], w_ih_b, w_hh_b, b_ih_b, b_hh_b)
    ref_out = jnp.concatenate([h1f_r, h1b_r], axis=-1)[None]
    ref_hn = jnp.stack([h1f_r, h1b_r], axis=0)
    ref_cn = jnp.stack([c1f_r, c1b_r], axis=0)

    assert output.shape == (1, B, 2 * H)
    assert h_n.shape == (2, B, H) and c_n.shape == (2, B, H)
    assert jnp.allclose(output, ref_out, atol=2e-5, rtol=1e-5)
    assert jnp.allclose(h_n, ref_hn, atol=2e-5, rtol=1e-5)
    assert jnp.allclose(c_n, ref_cn, atol=2e-5, rtol=1e-5)
    print("KERNEL_OK")
</pallas_src>

<mosaic_0001>
module attributes {stable_mosaic.version = 11 : i64} {
  func.func @_bi_lstm_step_kernel(%arg0: i32, %arg1: memref<16x1xi32, #tpu.memory_space<vmem>>, %arg2: memref<128x256xf32, #tpu.memory_space<vmem>>, %arg3: memref<1x256xf32, #tpu.memory_space<vmem>>, %arg4: memref<2x16x64xf32, #tpu.memory_space<vmem>>, %arg5: memref<16x128xf32, #tpu.memory_space<vmem>>) attributes {dimension_semantics = [#tpu.dimension_semantics<parallel>], iteration_bounds = array<i64: 1>, scalar_prefetch = 0 : i64, scratch_operands = 0 : i64, tpu.core_type = #tpu.core_type<tc>, window_params = [{transform_indices = @transform_0, window_bounds = array<i64: 16, 1>}, {pipeline_mode = #tpu.pipeline_mode<synchronous>, transform_indices = @transform_1, window_bounds = array<i64: 128, 256>}, {pipeline_mode = #tpu.pipeline_mode<synchronous>, transform_indices = @transform_2, window_bounds = array<i64: 1, 256>}, {transform_indices = @transform_3, window_bounds = array<i64: 2, 16, 64>}, {transform_indices = @transform_4, window_bounds = array<i64: 16, 128>}]} {
    %c0 = arith.constant 0 : index
    %c0_0 = arith.constant 0 : index
    %0 = vector.load %arg1[%c0, %c0_0] : memref<16x1xi32, #tpu.memory_space<vmem>>, vector<16x1xi32>
    %1 = tpu.iota {dimensions = array<i32: 1>} : vector<16x64xi32>
    %2 = vector.broadcast %0 : vector<16x1xi32> to vector<16x64xi32>
    %3 = arith.cmpi eq, %1, %2 : vector<16x64xi32>
    %4 = arith.extui %3 : vector<16x64xi1> to vector<16x64xi32>
    %5 = arith.sitofp %4 : vector<16x64xi32> to vector<16x64xf32>
    %c0_1 = arith.constant 0 : index
    %c0_2 = arith.constant 0 : index
    %c0_3 = arith.constant 0 : index
    %6 = vector.load %arg4[%c0_1, %c0_2, %c0_3] : memref<2x16x64xf32, #tpu.memory_space<vmem>>, vector<1x16x64xf32>
    %7 = vector.shape_cast %6 : vector<1x16x64xf32> to vector<16x64xf32>
    %c1 = arith.constant 1 : index
    %c0_4 = arith.constant 0 : index
    %c0_5 = arith.constant 0 : index
    %8 = vector.load %arg4[%c1, %c0_4, %c0_5] : memref<2x16x64xf32, #tpu.memory_space<vmem>>, vector<1x16x64xf32>
    %9 = vector.shape_cast %8 : vector<1x16x64xf32> to vector<16x64xf32>
    %10 = tpu.concatenate %5, %7 in 1 : vector<16x64xf32>, vector<16x64xf32> -> vector<16x128xf32>
    %c0_6 = arith.constant 0 : index
    %c0_7 = arith.constant 0 : index
    %11 = vector.load %arg2[%c0_6, %c0_7] : memref<128x256xf32, #tpu.memory_space<vmem>>, vector<128x256xf32>
    %cst = arith.constant dense<0.000000e+00> : vector<16x256xf32>
    %12 = tpu.matmul %10, %11, %cst {dimension_numbers = #tpu.dot_dimension_numbers<[1], [0], [0], [1], [0, 0, 1, 1], [], []>} : vector<16x128xf32>, vector<128x256xf32>, vector<16x256xf32> -> vector<16x256xf32>
    %c0_8 = arith.constant 0 : index
    %c0_9 = arith.constant 0 : index
    %13 = vector.load %arg3[%c0_8, %c0_9] : memref<1x256xf32, #tpu.memory_space<vmem>>, vector<1x256xf32>
    %14 = vector.broadcast %13 : vector<1x256xf32> to vector<16x256xf32>
    %15 = arith.addf %12, %14 : vector<16x256xf32>
    %16 = vector.extract_strided_slice %15 {offsets = [0, 0], sizes = [16, 192], strides = [1, 1]} : vector<16x256xf32> to vector<16x192xf32>
    %17 = arith.negf %16 : vector<16x192xf32>
    %18 = math.exp %17 : vector<16x192xf32>
    %cst_10 = arith.constant 1.000000e+00 : f32
    %19 = vector.broadcast %cst_10 : f32 to vector<16x192xf32>
    %20 = arith.addf %19, %18 : vector<16x192xf32>
    %21 = arith.divf %19, %20 : vector<16x192xf32>
    %22 = vector.extract_strided_slice %15 {offsets = [0, 192], sizes = [16, 64], strides = [1, 1]} : vector<16x256xf32> to vector<16x64xf32>
    %23 = math.tanh %22 : vector<16x64xf32>
    %24 = vector.extract_strided_slice %21 {offsets = [0, 0], sizes = [16, 64], strides = [1, 1]} : vector<16x192xf32> to vector<16x64xf32>
    %25 = vector.extract_strided_slice %21 {offsets = [0, 64], sizes = [16, 64], strides = [1, 1]} : vector<16x192xf32> to vector<16x64xf32>
    %26 = vector.extract_strided_slice %21 {offsets = [0, 128], sizes = [16, 64], strides = [1, 1]} : vector<16x192xf32> to vector<16x64xf32>
    %27 = arith.mulf %25, %9 : vector<16x64xf32>
    %28 = arith.mulf %24, %23 : vector<16x64xf32>
    %29 = arith.addf %27, %28 : vector<16x64xf32>
    %30 = math.tanh %29 : vector<16x64xf32>
    %31 = arith.mulf %26, %30 : vector<16x64xf32>
    %32 = tpu.concatenate %31, %29 in 1 : vector<16x64xf32>, vector<16x64xf32> -> vector<16x128xf32>
    %c0_11 = arith.constant 0 : index
    %c0_12 = arith.constant 0 : index
    %33 = vector.load %arg5[%c0_11, %c0_12] : memref<16x128xf32, #tpu.memory_space<vmem>>, vector<16x128xf32>
    tpu.vector_store %arg5[%c0_11, %c0_12], %32 {strides = array<i32>} : memref<16x128xf32, #tpu.memory_space<vmem>>, vector<16x128xf32>,
    return
  }
  func.func @transform_0(%arg0: i32) -> (i32, i32) {
    %c0_i32 = arith.constant 0 : i32
    %c0_i32_0 = arith.constant 0 : i32
    return %arg0, %c0_i32 : i32, i32
  }
  func.func @transform_1(%arg0: i32) -> (i32, i32) {
    %c0_i32 = arith.constant 0 : i32
    %c0_i32_0 = arith.constant 0 : i32
    %c0_i32_1 = arith.constant 0 : i32
    return %c0_i32, %c0_i32_0 : i32, i32
  }
  func.func @transform_2(%arg0: i32) -> (i32, i32) {
    %c0_i32 = arith.constant 0 : i32
    %c0_i32_0 = arith.constant 0 : i32
    %c0_i32_1 = arith.constant 0 : i32
    return %c0_i32, %c0_i32_0 : i32, i32
  }
  func.func @transform_3(%arg0: i32) -> (i32, i32, i32) {
    %c0_i32 = arith.constant 0 : i32
    %c0_i32_0 = arith.constant 0 : i32
    %c0_i32_1 = arith.constant 0 : i32
    return %c0_i32, %arg0, %c0_i32_0 : i32, i32, i32
  }
  func.func @transform_4(%arg0: i32) -> (i32, i32) {
    %c0_i32 = arith.constant 0 : i32
    %c0_i32_0 = arith.constant 0 : i32
    return %arg0, %c0_i32 : i32, i32
  }
}

</mosaic_0001>

<llo_original>
// kernel: tpu_custom_call.1
$region0: #{tpu_custom_call.1}
  #allocation0 [shape = 'u32[]', space=smem, size = 0x4, offset = 0x4, fixed_abs, tag = 'smem constant byte address 0x4 - core index']
  #allocation1 [shape = 'u32[144,128]{1,0:T(1,128)}', space=vmem, size = 0x12000, scoped, tag = 'internal scratch']
  %s0 = inlined_call_operand.vmem [shape: s32[16,1], index: 0, kind: input, shape index: {}]
  %s1 = inlined_call_operand.hbm [shape: f32[128,256], index: 1, kind: input, shape index: {}]
  %s2 = inlined_call_operand.vmem [shape: f32[1,256], index: 2, kind: input, shape index: {}]
  %s3 = inlined_call_operand.hbm [shape: f32[2,16,64], index: 3, kind: input, shape index: {}]
  %s4 = inlined_call_operand.hbm [shape: f32[16,128], index: 4, kind: output, shape index: {}]
  %s5 = sld [smem:[#allocation0]]
  $region34: #{tpu_custom_call.1} parent=0
    _
  %s7 = ssub.s32 1, %s5
  %s8 = scalar_select 0, %s7, %s5
  $region1: #{tpu_custom_call.1} parent=0
    #allocation2 [shape = 'u8[131072]{0}', space=vmem, size = 0x20000, scoped, tag = 'input window, operand 1, single buffered']
    #allocation3 [shape = 's32[1]{0}', space=sflag, size = 0x4, scoped, tag = 'scoped memory for tpu_custom_call.1']
    #allocation4 [shape = 's32[1]{0}', space=sflag, size = 0x4, scoped, tag = 'scoped memory for tpu_custom_call.1']
    #allocation5 [shape = 'u8[16384]{0}', space=vmem, size = 0x4000, scoped, tag = 'input window, operand 3, single buffered']
    #allocation6 [shape = 's32[1]{0}', space=sflag, size = 0x4, scoped, tag = 'scoped memory for tpu_custom_call.1']
    #allocation7 [shape = 'u8[8192]{0}', space=vmem, size = 0x2000, scoped, tag = 'output window, operand 0, single buffered']
    %9 = vsyncpa [#allocation3], 0
    %10 = vsyncpa [#allocation6], 0
    %11 = vsyncpa [#allocation4], 0
    // Predicated region
    $region2: #{tpu_custom_call.1} parent=1 // pred_check
      _
    $region3: #{tpu_custom_call.1} parent=1 // pred_check_branch
      %13 = sbr.rel (0) target = $region5
    $region4: #{tpu_custom_call.1} parent=1 // pred_region
      _
    $region5: #{tpu_custom_call.1} parent=1 // pred_fallthru
      _
    // Predicated region
    $region6: #{tpu_custom_call.1} parent=1 // pred_check
      _
    $region7: #{tpu_custom_call.1} parent=1 // pred_check_branch
      %15 = sbr.rel (0) target = $region9
    $region8: #{tpu_custom_call.1} parent=1 // pred_region
      %s17 = ssub.s32 4096, 4096
      %18 = vsyncadd [#allocation3], %s17
      %s19 = sshll.u32 [#allocation2], 4
      %s20 = int_to_ptr.vmem [resolvable:$true] %s19
      %25 = dma.hbm_to_vmem [thread:$0]  %s1, 4096, %s20, [#allocation3], 256, 256, 16
    $region9: #{tpu_custom_call.1} parent=1 // pred_fallthru
      _
    // Predicated region
    $region10: #{tpu_custom_call.1} parent=1 // pred_check
      _
    $region11: #{tpu_custom_call.1} parent=1 // pred_check_branch
      %27 = sbr.rel (0) target = $region13
    $region12: #{tpu_custom_call.1} parent=1 // pred_region
      _
    $region13: #{tpu_custom_call.1} parent=1 // pred_fallthru
      _
    // Predicated region
    $region14: #{tpu_custom_call.1} parent=1 // pred_check
      _
    $region15: #{tpu_custom_call.1} parent=1 // pred_check_branch
      %29 = sbr.rel (0) target = $region17
    $region16: #{tpu_custom_call.1} parent=1 // pred_region
      %s31 = ssub.s32 512, 512
      %32 = vsyncadd [#allocation6], %s31
      %s33 = sshll.u32 [#allocation5], 4
      %s34 = int_to_ptr.vmem [resolvable:$true] %s33
      %39 = dma.hbm_to_vmem [thread:$0]  %s3, 512, %s34, [#allocation6], 128, 128, 8
    $region17: #{tpu_custom_call.1} parent=1 // pred_fallthru
      _
    // Predicated region
    $region18: #{tpu_custom_call.1} parent=1 // pred_check
      _
    $region19: #{tpu_custom_call.1} parent=1 // pred_check_branch
      %41 = sbr.rel (0) target = $region21
    $region20: #{tpu_custom_call.1} parent=1 // pred_region
      %42 = dma.done [#allocation3], 4096
    $region21: #{tpu_custom_call.1} parent=1 // pred_fallthru
      _
    // Predicated region
    $region22: #{tpu_custom_call.1} parent=1 // pred_check
      _
    $region23: #{tpu_custom_call.1} parent=1 // pred_check_branch
      %44 = sbr.rel (0) target = $region25
    $region24: #{tpu_custom_call.1} parent=1 // pred_region
      %45 = dma.done [#allocation6], 512
    $region25: #{tpu_custom_call.1} parent=1 // pred_fallthru
      _
    %v46 = vld [vmem:[%s0] sm:$0xff]
    %v47 = vld [vmem:[%s0 + $0x8] sm:$0xff]
    %v48 = vlaneseq
    %v49 = vand.u32 %v48, 127
    %50 = vset.pattern.permute.xlu0 0
    %51 = vperm.xlu0 %50, %v46
    %v52 = vpop.permute.xlu0 %51
    %53 = vset.pattern.permute.xlu0 0
    %54 = vperm.xlu0 %53, %v47
    %v55 = vpop.permute.xlu0 %54
    %vm56 = vcmp.eq.s32.totalorder %v49, %v52
    %vm57 = vcmp.eq.s32.totalorder %v49, %v55
    %v58 = vsel %vm56, 1, 0
    %v59 = vsel %vm57, 1, 0
    %v60 = vcvt.s32.f32 %v58
    %v61 = vcvt.s32.f32 %v59
    %v62 = vld [vmem:[#allocation5] sm:$0xff]
    %v63 = vld [vmem:[#allocation5 + $0x8] sm:$0xff]
    %s64 = scalar_lea.vmem [#allocation5], 16
    %v65 = vld [vmem:[%s64] sm:$0xff]
    %v66 = vld [vmem:[%s64 + $0x8] sm:$0xff]
    %69 = vrot.lane.b32.xlu0 %v62, 64
    %v70 = vpop.permute.xlu0 %69
    %71 = vrot.lane.b32.xlu0 %v63, 64
    %v72 = vpop.permute.xlu0 %71
    %vm75 = vcmask 523264
    %v76 = vsel %vm75, %v60, %v70
    %v77 = vsel %vm75, %v61, %v72
    %v78 = vld [vmem:[#allocation2] sm:$0xff]
    %v79 = vld [vmem:[#allocation2 + $0x8] sm:$0xff]
    %v80 = vld [vmem:[#allocation2 + $0x10] sm:$0xff]
    %v81 = vld [vmem:[#allocation2 + $0x18] sm:$0xff]
    %v82 = vld [vmem:[#allocation2 + $0x20] sm:$0xff]
    %v83 = vld [vmem:[#allocation2 + $0x28] sm:$0xff]
    %v84 = vld [vmem:[#allocation2 + $0x30] sm:$0xff]
    %v85 = vld [vmem:[#allocation2 + $0x38] sm:$0xff]
    %v86 = vld [vmem:[#allocation2 + $0x40] sm:$0xff]
    %v87 = vld [vmem:[#allocation2 + $0x48] sm:$0xff]
    %v88 = vld [vmem:[#allocation2 + $0x50] sm:$0xff]
    %v89 = vld [vmem:[#allocation2 + $0x58] sm:$0xff]
    %v90 = vld [vmem:[#allocation2 + $0x60] sm:$0xff]
    %v91 = vld [vmem:[#allocation2 + $0x68] sm:$0xff]
    %v92 = vld [vmem:[#allocation2 + $0x70] sm:$0xff]
    %v93 = vld [vmem:[#allocation2 + $0x78] sm:$0xff]
    %v94 = vld [vmem:[#allocation2 + $0x80] sm:$0xff]
    %v95 = vld [vmem:[#allocation2 + $0x88] sm:$0xff]
    %v96 = vld [vmem:[#allocation2 + $0x90] sm:$0xff]
    %v97 = vld [vmem:[#allocation2 + $0x98] sm:$0xff]
    %v98 = vld [vmem:[#allocation2 + $0xa0] sm:$0xff]
    %v99 = vld [vmem:[#allocation2 + $0xa8] sm:$0xff]
    %v100 = vld [vmem:[#allocation2 + $0xb0] sm:$0xff]
    %v101 = vld [vmem:[#allocation2 + $0xb8] sm:$0xff]
    %v102 = vld [vmem:[#allocation2 + $0xc0] sm:$0xff]
    %v103 = vld [vmem:[#allocation2 + $0xc8] sm:$0xff]
    %v104 = vld [vmem:[#allocation2 + $0xd0] sm:$0xff]
    %v105 = vld [vmem:[#allocation2 + $0xd8] sm:$0xff]
    %v106 = vld [vmem:[#allocation2 + $0xe0] sm:$0xff]
    %v107 = vld [vmem:[#allocation2 + $0xe8] sm:$0xff]
    %v108 = vld [vmem:[#allocation2 + $0xf0] sm:$0xff]
    %v109 = vld [vmem:[#allocation2 + $0xf8] sm:$0xff]
    %v110 = vld [vmem:[%s2] sm:$0x3]
    %v112 = vlaneseq
    %v113 = vshrl.u32 %v112, 7
    %v114 = vsub.s32 0, %v113
    %v115 = vrot.slane %v110, %v114
    %v116 = vlaneseq
    %v117 = vshrl.u32 %v116, 7
    %v118 = vsub.s32 1, %v117
    %v119 = vrot.slane %v110, %v118
    %122 = vmatprep.subr.mxu0 %v109
    %123 = vmatpush1.msra.mxu0 %v108
    %124 = vmatprep.subr.mxu0 %v107
    %125 = vmatpush1.msra.mxu0 %v106
    %126 = vmatprep.subr.mxu0 %v105
    %127 = vmatpush1.msra.mxu0 %v104
    %128 = vmatprep.subr.mxu0 %v103
    %129 = vmatpush1.msra.mxu0 %v102
    %130 = vmatprep.subr.mxu0 %v101
    %131 = vmatpush1.msra.mxu0 %v100
    %132 = vmatprep.subr.mxu0 %v99
    %133 = vmatpush1.msra.mxu0 %v98
    %134 = vmatprep.subr.mxu0 %v97
    %135 = vmatpush1.msra.mxu0 %v96
    %136 = vmatprep.subr.mxu0 %v95
    %137 = vmatpush1.msra.mxu0 %v94
    %138 = vmatprep.subr.mxu0 %v93
    %139 = vmatpush1.msra.mxu0 %v92
    %140 = vmatprep.subr.mxu0 %v91
    %141 = vmatpush1.msra.mxu0 %v90
    %142 = vmatprep.subr.mxu0 %v89
    %143 = vmatpush1.msra.mxu0 %v88
    %144 = vmatprep.subr.mxu0 %v87
    %145 = vmatpush1.msra.mxu0 %v86
    %146 = vmatprep.subr.mxu0 %v85
    %147 = vmatpush1.msra.mxu0 %v84
    %148 = vmatprep.subr.mxu0 %v83
    %149 = vmatpush1.msra.mxu0 %v82
    %150 = vmatprep.subr.mxu0 %v81
    %151 = vmatpush1.msra.mxu0 %v80
    %152 = vmatprep.subr.mxu0 %v79
    %153 = vmatpush1.msra.mxu0 %v78
    %154 = vmatprep.subr.mxu0 0.0
    %155 = vmatpush2.msra.mxu0 0.0
    %156 = vmatprep.subr.mxu0 0.0
    %157 = vmatpush2.msra.mxu0 0.0
    %158 = vmatprep.subr.mxu0 0.0
    %159 = vmatpush2.msra.mxu0 0.0
    %160 = vmatprep.subr.mxu0 0.0
    %161 = vmatpush2.msra.mxu0 0.0
    %162 = vmatprep.subr.mxu0 0.0
    %163 = vmatpush2.msra.mxu0 0.0
    %164 = vmatprep.subr.mxu0 0.0
    %165 = vmatpush2.msra.mxu0 0.0
    %166 = vmatprep.subr.mxu0 0.0
    %167 = vmatpush2.msra.mxu0 0.0
    %168 = vmatprep.subr.mxu0 0.0
    %169 = vmatpush2.msra.mxu0 0.0
    %170 = vmatprep.subr.mxu0 0.0
    %171 = vmatpush2.msra.mxu0 0.0
    %172 = vmatprep.subr.mxu0 0.0
    %173 = vmatpush2.msra.mxu0 0.0
    %174 = vmatprep.subr.mxu0 0.0
    %175 = vmatpush2.msra.mxu0 0.0
    %176 = vmatprep.subr.mxu0 0.0
    %177 = vmatpush2.msra.mxu0 0.0
    %178 = vmatprep.subr.mxu0 0.0
    %179 = vmatpush2.msra.mxu0 0.0
    %180 = vmatprep.subr.mxu0 0.0
    %181 = vmatpush2.msra.mxu0 0.0
    %182 = vmatprep.subr.mxu0 0.0
    %183 = vmatpush2.msra.mxu0 0.0
    %184 = vmatprep.subr.mxu0 0.0
    %185 = vmatpush2.msra.mxu0 0.0
    %186 = vmatprep.mubr.f32.mxu0 0.0
    %187 = vmatmul.mubr.f32.gmra.mxu0 %v76
    %v188 = vpop.f32.mrf.mxu0
    %v189 = vadd.f32 %v115, %v188
    %v190 = vpop.f32.mrf.mxu0
    %v191 = vadd.f32 %v119, %v190
    %192 = vmatprep.mubr.f32.mxu0 0.0
    %193 = vmatmul.mubr.f32.gmra.mxu0 %v77
    %v194 = vpop.f32.mrf.mxu0
    %v195 = vadd.f32 %v115, %v194
    %v196 = vpop.f32.mrf.mxu0
    %v197 = vadd.f32 %v119, %v196
    %198 = vdwg.mxu0
    %v199 = vxor.u32 %v189, 2147483648
    %v200 = vxor.u32 %v191, 2147483648
    %v201 = vxor.u32 %v195, 2147483648
    %v202 = vxor.u32 %v197, 2147483648
    %v203 = vmul.f32 %v199, 1.442695
    %v204 = vpow.pop %v203
    %v205 = vmul.f32 %v200, 1.442695
    %v206 = vpow.pop %v205
    %v207 = vmul.f32 %v201, 1.442695
    %v208 = vpow.pop %v207
    %v209 = vmul.f32 %v202, 1.442695
    %v210 = vpow.pop %v209
    %v211 = vadd.f32 %v204, 1.0
    %v212 = vadd.f32 %v206, 1.0
    %v213 = vadd.f32 %v208, 1.0
    %v214 = vadd.f32 %v210, 1.0
    %v215 = vrcp.pop %v211
    %v216 = vmul.f32 1.0, %v215
    %v217 = vrcp.pop %v212
    %v218 = vmul.f32 1.0, %v217
    %v219 = vrcp.pop %v213
    %v220 = vmul.f32 1.0, %v219
    %v221 = vrcp.pop %v214
    %v222 = vmul.f32 1.0, %v221
    %v223 = vtanh.pop %v191
    %v224 = vtanh.pop %v197
    %227 = vrot.lane.b32.xlu0 %v65, 64
    %v228 = vpop.permute.xlu0 %227
    %229 = vrot.lane.b32.xlu0 %v66, 64
    %v230 = vpop.permute.xlu0 %229
    %v233 = vmul.f32 %v216, %v228
    %v234 = vmul.f32 %v220, %v230
    %237 = vrot.lane.b32.xlu0 %v223, 64
    %v238 = vpop.permute.xlu0 %237
    %239 = vrot.lane.b32.xlu0 %v224, 64
    %v240 = vpop.permute.xlu0 %239
    %v243 = vmul.f32 %v216, %v238
    %v244 = vmul.f32 %v220, %v240
    %247 = vrot.lane.b32.xlu0 %v243, 64
    %v248 = vpop.permute.xlu0 %247
    %249 = vrot.lane.b32.xlu0 %v244, 64
    %v250 = vpop.permute.xlu0 %249
    %v253 = vadd.f32 %v233, %v248
    %v254 = vadd.f32 %v234, %v250
    %v255 = vtanh.pop %v253
    %v256 = vtanh.pop %v254
    %259 = vrot.lane.b32.xlu0 %v255, 64
    %v260 = vpop.permute.xlu0 %259
    %261 = vrot.lane.b32.xlu0 %v256, 64
    %v262 = vpop.permute.xlu0 %261
    %v265 = vmul.f32 %v218, %v260
    %v266 = vmul.f32 %v222, %v262
    %v267 = vsel %vm75, %v265, %v253
    %v268 = vsel %vm75, %v266, %v254
    %269 = vst [vmem:[#allocation7] sm:$0xff] %v267
    %270 = vst [vmem:[#allocation7 + $0x8] sm:$0xff] %v268
    // Predicated region
    $region26: #{tpu_custom_call.1} parent=1 // pred_check
      _
    $region27: #{tpu_custom_call.1} parent=1 // pred_check_branch
      %272 = sbr.rel (0) target = $region29
    $region28: #{tpu_custom_call.1} parent=1 // pred_region
      %s274 = ssub.s32 256, 256
      %275 = vsyncadd [#allocation4], %s274
      %s276 = sshll.u32 [#allocation7], 4
      %s277 = int_to_ptr.vmem [resolvable:$true] %s276
      %282 = dma.vmem_to_hbm [thread:$0]  %s277, 256, %s4, [#allocation4], 128, 128, 8
    $region29: #{tpu_custom_call.1} parent=1 // pred_fallthru
      _
    // Predicated region
    $region30: #{tpu_custom_call.1} parent=1 // pred_check
      _
    $region31: #{tpu_custom_call.1} parent=1 // pred_check_branch
      %284 = sbr.rel (0) target = $region33
    $region32: #{tpu_custom_call.1} parent=1 // pred_region
      %285 = dma.done [#allocation4], 256
    $region33: #{tpu_custom_call.1} parent=1 // pred_fallthru
      _
    %286 = vsyncpa [#allocation3], 1
    %287 = vsyncpa [#allocation6], 1
    %288 = vsyncpa [#allocation4], 1

</llo_original>
